<compile_context>
chip_gen: v6e
topology: v6e:2x2x1
jax: 0.10.0
libtpu: 0.0.40
codegen_flags: <defaults>
</compile_context>

<pallas_src>
import math

import jax
import jax.numpy as jnp
from jax import lax
from jax.experimental import pallas as pl
from jax.experimental.pallas import tpu as pltpu

_EPS = 1e-36                 # clamp for sum-of-squares (guards padded/ragged rows)
_PER_BUFFER_F32 = 2 << 20    # ~2 MiB of f32 per pipeline buffer


def _softplus_f32(x):
    # PyTorch nn.Softplus numerics (beta=1, threshold=20).
    x_safe = jnp.minimum(x, 20.0)
    return jnp.where(x > 20.0, x, jnp.log1p(jnp.exp(x_safe)))


def _make_rowwise_kernel(num_segments, seg_width):
    """Block (rows, L): L2-normalize each length-`seg_width` lane segment."""

    def kernel(x_ref, o_ref):
        x = x_ref[...].astype(jnp.float32)     # f32 compute (v5e has no bf16 EUP)
        sp = _softplus_f32(x)
        sq = sp * sp
        if num_segments == 1:
            ssq = jnp.sum(sq, axis=-1, keepdims=True)
            scale = lax.rsqrt(jnp.maximum(ssq, _EPS))        # rsqrt + mul, no divide
        else:
            # Lane-packed path: k original rows live in one 128-lane vreg row.
            # Exact f32 segmented reduction via k masked lane reductions
            # (plain VPU selects + XLU reduces; store stays lane-dense).
            seg_id = lax.broadcasted_iota(jnp.int32, sq.shape, 1) // seg_width
            scale = jnp.zeros_like(sq)
            for i in range(num_segments):                    # k <= 8, unrolled
                m = seg_id == i
                ssq_i = jnp.sum(jnp.where(m, sq, 0.0), axis=-1, keepdims=True)
                inv_i = lax.rsqrt(jnp.maximum(ssq_i, _EPS))
                scale = jnp.where(m, inv_i, scale)
        o_ref[...] = (sp * scale).astype(o_ref.dtype)

    return kernel


def _middle_axis_kernel(x_ref, o_ref):
    """Block (tp, D, tq): L2-normalize along the middle (reduction) axis."""
    x = x_ref[...].astype(jnp.float32)
    sp = _softplus_f32(x)
    ssq = jnp.sum(sp * sp, axis=1, keepdims=True)
    scale = lax.rsqrt(jnp.maximum(ssq, _EPS))
    o_ref[...] = (sp * scale).astype(o_ref.dtype)


# ----------------------------- wrapper helpers --------------------------------

def _sublane_multiple(dtype):
    itemsize = jnp.dtype(dtype).itemsize
    return max(8, 32 // max(1, itemsize))      # f32 -> 8, bf16 -> 16, int8 -> 32


def _min_grid_steps():
    cores = 1
    try:
        kind = jax.devices()[0].device_kind.lower()
        if ("v4" in kind) or ("v5p" in kind) or ("v7" in kind):
            cores = 2                           # dual-TensorCore chips
    except Exception:
        pass
    return 4 * cores                            # >= 4 steps per TensorCore


def _round_up(n, m):
    return ((n + m - 1) // m) * m


def _vmem_limit(tile_io_bytes, tile_f32_bytes):
    # 2 io arrays x 2 pipeline buffers + generous room for f32 intermediates.
    est = 4 * tile_io_bytes + 4 * tile_f32_bytes + (1 << 20)
    return int(min(48 << 20, max(32 << 20, 2 * est)))


# ------------------------------- entry point -----------------------------------

def soft_softmax(x, dim=-1, *, block_rows=None):
    """Pallas implementation of SoftSoftMax.forward: softplus + L2-normalize along `dim`."""
    axis = dim % x.ndim
    if axis != x.ndim - 1:
        return _soft_softmax_middle(x, axis)
    return _soft_softmax_last(x, block_rows=block_rows)


def _soft_softmax_last(x, *, block_rows=None):
    shape = x.shape
    D = shape[-1]
    R = math.prod(shape[:-1]) if len(shape) > 1 else 1
    x2 = x.reshape(R, D)
    itemsize = jnp.dtype(x.dtype).itemsize
    sub = _sublane_multiple(x.dtype)

    # --- lane packing: small D -> k rows share one 128-lane vreg row ------------
    k = 1
    if 16 <= D < 128 and 128 % D == 0:
        k = 128 // D
    R_pad = _round_up(R, k)
    if R_pad != R:
        x2 = jnp.pad(x2, ((0, R_pad - R), (0, 0)))
    Rp = R_pad // k
    L = k * D
    x2 = x2.reshape(Rp, L)                      # contiguous reshape: free
    lanes_p = _round_up(L, 128)

    # --- adaptive, generation-aware row tile ------------------------------------
    if block_rows is None:
        rows_fit = max(sub, (_PER_BUFFER_F32 // (lanes_p * 4)) // sub * sub)
        min_steps = _min_grid_steps()
        if Rp > min_steps * sub:
            # Enough work: guarantee >= min_steps grid steps for pipeline overlap
            # (and megacore sharding on dual-TC chips).
            target = max(sub, (pl.cdiv(Rp, min_steps) // sub) * sub)
            rows_fit = min(rows_fit, target)
        block_rows = rows_fit
    block_rows = min(block_rows, Rp)
    if block_rows < Rp:
        block_rows = max(sub, (block_rows // sub) * sub)   # sublane-aligned tiles
    # NOTE: for astronomically large D a single `sub`-row block could exceed the
    # VMEM budget; that regime would need a two-pass (chunked-D) reduction.

    grid = (pl.cdiv(Rp, block_rows),)
    spec = pl.BlockSpec((block_rows, L), lambda i: (i, 0))

    tile_io = block_rows * lanes_p * itemsize
    tile_f32 = block_rows * lanes_p * 4

    out2 = pl.pallas_call(
        _make_rowwise_kernel(k, D),
        out_shape=jax.ShapeDtypeStruct((Rp, L), x.dtype),
        grid_spec=pltpu.PrefetchScalarGridSpec(
            num_scalar_prefetch=0,
            grid=grid,
            in_specs=[spec],
            out_specs=spec,
        ),
        compiler_params=pltpu.CompilerParams(
            dimension_semantics=("parallel",),
            vmem_limit_bytes=_vmem_limit(tile_io, tile_f32),
        ),
    )(x2)

    out = out2.reshape(R_pad, D)
    if R_pad != R:
        out = out[:R]
    return out.reshape(shape)


def _soft_softmax_middle(x, axis):
    # Keep the original layout (no moveaxis transpose round-trip): view as
    # (pre, dim, post); reduce over the middle axis inside each block.
    shape = x.shape
    P = math.prod(shape[:axis]) if axis > 0 else 1
    D = shape[axis]
    Q = math.prod(shape[axis + 1:])
    x3 = x.reshape(P, D, Q)
    itemsize = jnp.dtype(x.dtype).itemsize

    # Trailing (lane) axis tile: full Q if small, else lane-aligned chunks.
    if Q <= 512:
        tq = Q
    else:
        tq = 512
        while tq > 128 and _round_up(D, 8) * tq * 4 > _PER_BUFFER_F32:
            tq //= 2
    D_pad = _round_up(D, 8)
    tq_pad = _round_up(tq, 128)

    slab_f32 = D_pad * tq_pad * 4
    tp = max(1, _PER_BUFFER_F32 // slab_f32)
    min_steps = _min_grid_steps()
    steps_q = pl.cdiv(Q, tq)
    if steps_q < min_steps and P > 1:
        tp = min(tp, max(1, pl.cdiv(P, pl.cdiv(min_steps, steps_q))))
    tp = min(tp, P)

    grid = (pl.cdiv(P, tp), pl.cdiv(Q, tq))
    spec = pl.BlockSpec((tp, D, tq), lambda i, j: (i, 0, j))

    tile_io = tp * D_pad * tq_pad * itemsize
    tile_f32 = tp * slab_f32

    out3 = pl.pallas_call(
        _middle_axis_kernel,
        out_shape=jax.ShapeDtypeStruct((P, D, Q), x.dtype),
        grid_spec=pltpu.PrefetchScalarGridSpec(
            num_scalar_prefetch=0,
            grid=grid,
            in_specs=[spec],
            out_specs=spec,
        ),
        compiler_params=pltpu.CompilerParams(
            dimension_semantics=("parallel", "parallel"),
            vmem_limit_bytes=_vmem_limit(tile_io, tile_f32),
        ),
    )(x3)

    return out3.reshape(shape)


if __name__ == "__main__":
    key = jax.random.PRNGKey(0)
    k1, k2, k3 = jax.random.split(key, 3)

    # Case 1: lane-dense last dim (batch=2, seq=8, hidden=128).
    x1 = 3.0 * jax.random.normal(k1, (2, 8, 128), dtype=jnp.float32)
    # Case 2: small last dim (D=32) -> lane-packing path (k=4 rows per vreg row).
    x2 = 3.0 * jax.random.normal(k2, (4, 5, 32), dtype=jnp.float32)
    # Case 3: reduction over a non-last axis -> middle-axis path (no transposes).
    x3 = 3.0 * jax.random.normal(k3, (2, 16, 128), dtype=jnp.float32)

    y1 = soft_softmax(x1)
    y2 = soft_softmax(x2)
    y3 = soft_softmax(x3, dim=1)
    jax.block_until_ready((y1, y2, y3))

    def ref(x, axis=-1):
        sp = jnp.where(x > 20.0, x, jnp.log1p(jnp.exp(jnp.minimum(x, 20.0))))
        return sp / jnp.linalg.norm(sp, axis=axis, keepdims=True)

    assert jnp.allclose(y1, ref(x1), atol=1e-6, rtol=1e-5)
    assert jnp.allclose(y2, ref(x2), atol=1e-6, rtol=1e-5)
    assert jnp.allclose(y3, ref(x3, axis=1), atol=1e-6, rtol=1e-5)
    # Outputs are unit-L2 along the reduction axis.
    assert jnp.allclose(jnp.linalg.norm(y1, axis=-1), 1.0, atol=1e-5)
    assert jnp.allclose(jnp.linalg.norm(y2, axis=-1), 1.0, atol=1e-5)
    assert jnp.allclose(jnp.linalg.norm(y3, axis=1), 1.0, atol=1e-5)

    print("KERNEL_OK")
</pallas_src>

<mosaic_0001>
module attributes {stable_mosaic.version = 11 : i64} {
  func.func @kernel(%arg0: i32, %arg1: memref<16x128xf32, #tpu.memory_space<vmem>>, %arg2: memref<16x128xf32, #tpu.memory_space<vmem>>) attributes {dimension_semantics = [#tpu.dimension_semantics<parallel>], iteration_bounds = array<i64: 1>, scalar_prefetch = 0 : i64, scratch_operands = 0 : i64, tpu.core_type = #tpu.core_type<tc>, window_params = [{transform_indices = @transform_0, window_bounds = array<i64: 16, 128>}, {transform_indices = @transform_1, window_bounds = array<i64: 16, 128>}]} {
    %c0 = arith.constant 0 : index
    %c0_0 = arith.constant 0 : index
    %0 = vector.load %arg1[%c0, %c0_0] : memref<16x128xf32, #tpu.memory_space<vmem>>, vector<16x128xf32>
    %cst = arith.constant 2.000000e+01 : f32
    %1 = vector.broadcast %cst : f32 to vector<16x128xf32>
    %2 = arith.minimumf %0, %1 : vector<16x128xf32>
    %cst_1 = arith.constant 2.000000e+01 : f32
    %3 = vector.broadcast %cst_1 : f32 to vector<16x128xf32>
    %4 = arith.cmpf ogt, %0, %3 : vector<16x128xf32>
    %5 = math.exp %2 : vector<16x128xf32>
    %6 = math.log1p %5 : vector<16x128xf32>
    %7 = arith.select %4, %0, %6 : vector<16x128xi1>, vector<16x128xf32>
    %8 = arith.mulf %7, %7 : vector<16x128xf32>
    %cst_2 = arith.constant dense<0.000000e+00> : vector<16xf32>
    %9 = vector.multi_reduction <add>, %8, %cst_2 [1] : vector<16x128xf32> to vector<16xf32>
    %10 = vector.shape_cast %9 : vector<16xf32> to vector<16x1xf32>
    %cst_3 = arith.constant 1.000000e-36 : f32
    %11 = vector.broadcast %cst_3 : f32 to vector<16x1xf32>
    %12 = arith.maximumf %10, %11 : vector<16x1xf32>
    %13 = math.rsqrt %12 : vector<16x1xf32>
    %14 = vector.broadcast %13 : vector<16x1xf32> to vector<16x128xf32>
    %15 = arith.mulf %7, %14 : vector<16x128xf32>
    %c0_4 = arith.constant 0 : index
    %c0_5 = arith.constant 0 : index
    %16 = vector.load %arg2[%c0_4, %c0_5] : memref<16x128xf32, #tpu.memory_space<vmem>>, vector<16x128xf32>
    tpu.vector_store %arg2[%c0_4, %c0_5], %15 {strides = array<i32>} : memref<16x128xf32, #tpu.memory_space<vmem>>, vector<16x128xf32>,
    return
  }
  func.func @transform_0(%arg0: i32) -> (i32, i32) {
    %c0_i32 = arith.constant 0 : i32
    %c0_i32_0 = arith.constant 0 : i32
    return %arg0, %c0_i32 : i32, i32
  }
  func.func @transform_1(%arg0: i32) -> (i32, i32) {
    %c0_i32 = arith.constant 0 : i32
    %c0_i32_0 = arith.constant 0 : i32
    return %arg0, %c0_i32 : i32, i32
  }
}

</mosaic_0001>

<llo_original>
// kernel: tpu_custom_call.1
$region0: #{tpu_custom_call.1}
  #allocation0 [shape = 'u32[]', space=smem, size = 0x4, offset = 0x4, fixed_abs, tag = 'smem constant byte address 0x4 - core index']
  #allocation1 [shape = 'u32[144,128]{1,0:T(1,128)}', space=vmem, size = 0x12000, scoped, tag = 'internal scratch']
  %s0 = inlined_call_operand.hbm [shape: f32[16,128], index: 0, kind: input, shape index: {}]
  %s1 = inlined_call_operand.hbm [shape: f32[16,128], index: 1, kind: output, shape index: {}]
  %s2 = sld [smem:[#allocation0]]
  $region18: #{tpu_custom_call.1} parent=0
    _
  %s4 = ssub.s32 1, %s2
  %s5 = scalar_select 0, %s4, %s2
  $region1: #{tpu_custom_call.1} parent=0
    #allocation2 [shape = 'u8[8192]{0}', space=vmem, size = 0x2000, scoped, tag = 'input window, operand 0, single buffered']
    #allocation3 [shape = 's32[1]{0}', space=sflag, size = 0x4, scoped, tag = 'scoped memory for tpu_custom_call.1']
    #allocation4 [shape = 's32[1]{0}', space=sflag, size = 0x4, scoped, tag = 'scoped memory for tpu_custom_call.1']
    #allocation5 [shape = 'u8[8192]{0}', space=vmem, size = 0x2000, scoped, tag = 'output window, operand 0, single buffered']
    %6 = vsyncpa [#allocation3], 0
    %7 = vsyncpa [#allocation4], 0
    // Predicated region
    $region2: #{tpu_custom_call.1} parent=1 // pred_check
      _
    $region3: #{tpu_custom_call.1} parent=1 // pred_check_branch
      %9 = sbr.rel (0) target = $region5
    $region4: #{tpu_custom_call.1} parent=1 // pred_region
      %s11 = ssub.s32 256, 256
      %12 = vsyncadd [#allocation3], %s11
      %s13 = sshll.u32 [#allocation2], 4
      %s14 = int_to_ptr.vmem [resolvable:$true] %s13
      %19 = dma.hbm_to_vmem [thread:$0]  %s0, 256, %s14, [#allocation3], 128, 128, 8
    $region5: #{tpu_custom_call.1} parent=1 // pred_fallthru
      _
    // Predicated region
    $region6: #{tpu_custom_call.1} parent=1 // pred_check
      _
    $region7: #{tpu_custom_call.1} parent=1 // pred_check_branch
      %21 = sbr.rel (0) target = $region9
    $region8: #{tpu_custom_call.1} parent=1 // pred_region
      %22 = dma.done [#allocation3], 256
    $region9: #{tpu_custom_call.1} parent=1 // pred_fallthru
      _
    %v23 = vld [vmem:[#allocation2] sm:$0xff]
    %v24 = vld [vmem:[#allocation2 + $0x8] sm:$0xff]
    %v25 = vmin.f32 %v23, 20.0
    %v26 = vmin.f32 %v24, 20.0
    %vm27 = vcmp.gt.f32.partialorder %v23, 20.0
    %vm28 = vcmp.gt.f32.partialorder %v24, 20.0
    %v29 = vmul.f32 %v25, 1.442695
    %v30 = vpow.pop %v29
    %v31 = vmul.f32 %v26, 1.442695
    %v32 = vpow.pop %v31
    %v33 = vadd.f32 %v30, 1.0
    %v34 = vlog2.pop %v33
    %v35 = vmul.f32 %v34, 0.6931472
    %v36 = vmul.f32 -0.5, %v30
    %v37 = vadd.f32 %v36, 1.0
    %v38 = vmul.f32 %v37, %v30
    %v39 = vand.u32 2147483647, %v30
    %vm40 = vcmp.lt.f32.partialorder %v39, 0.0004427343
    %v41 = vsel %vm40, %v38, %v35
    %v42 = vadd.f32 %v32, 1.0
    %v43 = vlog2.pop %v42
    %v44 = vmul.f32 %v43, 0.6931472
    %v45 = vmul.f32 -0.5, %v32
    %v46 = vadd.f32 %v45, 1.0
    %v47 = vmul.f32 %v46, %v32
    %v48 = vand.u32 2147483647, %v32
    %vm49 = vcmp.lt.f32.partialorder %v48, 0.0004427343
    %v50 = vsel %vm49, %v47, %v44
    %v51 = vsel %vm27, %v23, %v41
    %v52 = vsel %vm28, %v24, %v50
    %v53 = vmul.f32 %v51, %v51
    %v54 = vmul.f32 %v52, %v52
    %55 = vadd.xlane.f32.xlu0 %v53
    %v56 = vpop.xlane.xlu0 %55
    %57 = vadd.xlane.f32.xlu0 %v54
    %v58 = vpop.xlane.xlu0 %57
    %v59 = vmax.f32 %v56, 1e-36
    %v60 = vmax.f32 %v58, 1e-36
    %v61 = vrsqrt.pop %v59
    %v62 = vrsqrt.pop %v60
    %v63 = vmul.f32 %v51, %v61
    %v64 = vmul.f32 %v52, %v62
    %65 = vst [vmem:[#allocation5] sm:$0xff] %v63
    %66 = vst [vmem:[#allocation5 + $0x8] sm:$0xff] %v64
    // Predicated region
    $region10: #{tpu_custom_call.1} parent=1 // pred_check
      _
    $region11: #{tpu_custom_call.1} parent=1 // pred_check_branch
      %68 = sbr.rel (0) target = $region13
    $region12: #{tpu_custom_call.1} parent=1 // pred_region
      %s70 = ssub.s32 256, 256
      %71 = vsyncadd [#allocation4], %s70
      %s72 = sshll.u32 [#allocation5], 4
      %s73 = int_to_ptr.vmem [resolvable:$true] %s72
      %78 = dma.vmem_to_hbm [thread:$0]  %s73, 256, %s1, [#allocation4], 128, 128, 8
    $region13: #{tpu_custom_call.1} parent=1 // pred_fallthru
      _
    // Predicated region
    $region14: #{tpu_custom_call.1} parent=1 // pred_check
      _
    $region15: #{tpu_custom_call.1} parent=1 // pred_check_branch
      %80 = sbr.rel (0) target = $region17
    $region16: #{tpu_custom_call.1} parent=1 // pred_region
      %81 = dma.done [#allocation4], 256
    $region17: #{tpu_custom_call.1} parent=1 // pred_fallthru
      _
    %82 = vsyncpa [#allocation3], 1
    %83 = vsyncpa [#allocation4], 1

</llo_original>
